<compile_context>
chip_gen: v6e
topology: v6e:2x2x1
jax: 0.10.0
libtpu: 0.0.40
codegen_flags: <defaults>
</compile_context>

<pallas_src>
import functools

import jax
import jax.numpy as jnp
from jax.experimental import pallas as pl
from jax.experimental.pallas import tpu as pltpu


# Lane/sublane-native tile sizes (f32 vreg = 8 sublanes x 128 lanes).
_TM = 8      # batch sublane alignment (B must be a multiple of 8)
_TN = 128    # lane tile on D_out
_TK = 128    # lane tile on D_in (reduction axis, innermost grid dim)


def _make_fused_step_kernel(inv_n: float):
    """Kernel body for one (step s, out-tile j, k-tile k) grid point."""

    def kernel(x_ref, w_ref, b_ref, y_ref, yhat_ref, loss_ref, acc_ref, sse_ref):
        j = pl.program_id(1)
        k = pl.program_id(2)
        nj = pl.num_programs(1)
        nk = pl.num_programs(2)

        # ---- init (P3) ----
        @pl.when(k == 0)
        def _init_acc():
            acc_ref[...] = jnp.zeros_like(acc_ref)

        @pl.when(jnp.logical_and(j == 0, k == 0))
        def _init_sse():
            sse_ref[...] = jnp.zeros_like(sse_ref)

        # ---- forward: K-tile of X @ W, bf16 x bf16 -> f32 MXU accumulate ----
        acc_ref[...] += jnp.dot(x_ref[...], w_ref[...],
                                preferred_element_type=jnp.float32)

        # ---- finalize this output tile at the last K step ----
        @pl.when(k == nk - 1)
        def _finalize_tile():
            yhat = acc_ref[...] + b_ref[...]                 # f32 (B, TN)
            yhat_ref[...] = yhat.astype(yhat_ref.dtype)      # lane-dense store
            diff = yhat - y_ref[...]                         # f32 loss path
            # per-lane partial sum of squared error (sublane reduce only)
            sse_ref[...] += jnp.sum(diff * diff, axis=0, keepdims=True)

        # ---- per-minibatch MSE: one cross-lane reduce at the very last tile ----
        @pl.when(jnp.logical_and(j == nj - 1, k == nk - 1))
        def _finalize_loss():
            total = jnp.sum(sse_ref[...], axis=-1, keepdims=True)    # (1, 1)
            loss_ref[...] = jnp.broadcast_to(total * inv_n, loss_ref.shape)

    return kernel


@jax.jit
def fused_eval_steps(Xs, ys, W, b):
    """Batched ModelWithTrainer._shared_eval_step over S minibatch steps.

    Xs: [S, B, D_in], ys: [S, B, D_out], W: [D_in, D_out], b: [1, D_out]
    Returns (losses [S] float32, y_hat [S, B, D_out] float32).
    """
    S, B, D_in = Xs.shape
    D_out = W.shape[1]
    assert B % _TM == 0 and D_in % _TK == 0 and D_out % _TN == 0, (
        "pad B to a multiple of 8 and D_in/D_out to multiples of 128")

    # bf16 operands for the MXU; accumulation and loss stay f32.
    Xb = Xs.astype(jnp.bfloat16)
    Wb = W.astype(jnp.bfloat16)
    bf = b.astype(jnp.float32)
    yf = ys.astype(jnp.float32)

    grid = (S, D_out // _TN, D_in // _TK)   # K (reduction) last

    yhat, loss_slab = pl.pallas_call(
        _make_fused_step_kernel(1.0 / float(B * D_out)),
        out_shape=(
            jax.ShapeDtypeStruct((S, B, D_out), jnp.float32),
            jax.ShapeDtypeStruct((S, 1, 128), jnp.float32),  # lane-dense loss slab
        ),
        grid_spec=pltpu.PrefetchScalarGridSpec(
            num_scalar_prefetch=0,
            grid=grid,
            in_specs=[
                pl.BlockSpec((None, B, _TK), lambda s, j, k: (s, 0, k)),   # X
                pl.BlockSpec((_TK, _TN),     lambda s, j, k: (k, j)),      # W
                pl.BlockSpec((1, _TN),       lambda s, j, k: (0, j)),      # b
                pl.BlockSpec((None, B, _TN), lambda s, j, k: (s, 0, j)),   # y
            ],
            out_specs=(
                pl.BlockSpec((None, B, _TN), lambda s, j, k: (s, 0, j)),   # y_hat
                pl.BlockSpec((None, 1, 128), lambda s, j, k: (s, 0, 0)),   # loss
            ),
            scratch_shapes=[
                pltpu.VMEM((B, _TN), jnp.float32),   # matmul f32 accumulator
                pltpu.VMEM((1, _TN), jnp.float32),   # per-lane partial SSE
            ],
        ),
        compiler_params=pltpu.CompilerParams(
            # minibatch axis is independent -> megacore-shardable on v7x
            dimension_semantics=("parallel", "arbitrary", "arbitrary"),
            # budget against v7x's 64 MiB physical VMEM, not v5e/v6e's 128 MiB
            vmem_limit_bytes=32 * 1024 * 1024,
        ),
    )(Xb, Wb, bf, yf)

    return loss_slab[:, 0, 0], yhat


def shared_eval_step(X, y, W, b):
    """Single-minibatch equivalent of ModelWithTrainer._shared_eval_step."""
    losses, yhat = fused_eval_steps(X[None], y[None], W, b)
    return losses[0], yhat[0]


def train_step(Xs, ys, W, b):
    """Mirrors ModelWithTrainer.train_step for S minibatches at once.

    Metrics hold DEVICE arrays (no float()/.item() host sync inside the step;
    the Trainer can convert outside jit when logging).
    """
    losses, _ = fused_eval_steps(Xs, ys, W, b)
    return losses, {"train loss": losses}


def eval_step(Xs, ys, W, b):
    """Mirrors ModelWithTrainer.eval_step for S minibatches at once."""
    losses, _ = fused_eval_steps(Xs, ys, W, b)
    return losses, {"test loss": losses}


if __name__ == "__main__":
    # S minibatch steps batched into one pallas_call; shapes are lane/sublane
    # aligned per the performance review (B % 8 == 0, D % 128 == 0).
    S, B, D_IN, D_OUT = 4, 8, 256, 256

    key = jax.random.PRNGKey(0)
    kx, ky, kw, kb = jax.random.split(key, 4)
    Xs = jax.random.normal(kx, (S, B, D_IN), dtype=jnp.float32)
    ys = jax.random.normal(ky, (S, B, D_OUT), dtype=jnp.float32)
    W = jax.random.normal(kw, (D_IN, D_OUT), dtype=jnp.float32) * 0.05
    b = jax.random.normal(kb, (1, D_OUT), dtype=jnp.float32) * 0.05

    losses, yhat = fused_eval_steps(Xs, ys, W, b)
    jax.block_until_ready((losses, yhat))

    # Plain-JAX reference using the same bf16-rounded operands, f32 math.
    Xr = Xs.astype(jnp.bfloat16).astype(jnp.float32)
    Wr = W.astype(jnp.bfloat16).astype(jnp.float32)
    ref_yhat = jnp.einsum("sbi,io->sbo", Xr, Wr,
                          precision=jax.lax.Precision.HIGHEST) + b
    ref_losses = jnp.mean((ref_yhat - ys) ** 2, axis=(1, 2))

    assert jnp.allclose(yhat, ref_yhat, atol=1e-3, rtol=1e-3), "y_hat mismatch"
    assert jnp.allclose(losses, ref_losses, atol=1e-3, rtol=1e-3), "loss mismatch"

    # Exercise the trainer-facing step functions (device arrays, no host sync).
    _, train_metrics = train_step(Xs, ys, W, b)
    _, eval_metrics = eval_step(Xs, ys, W, b)
    jax.block_until_ready((train_metrics["train loss"], eval_metrics["test loss"]))

    print("KERNEL_OK")
</pallas_src>

<mosaic_0001>
module attributes {stable_mosaic.version = 11 : i64} {
  func.func @kernel(%arg0: i32, %arg1: i32, %arg2: i32, %arg3: memref<1x8x128xbf16, #tpu.memory_space<vmem>>, %arg4: memref<128x128xbf16, #tpu.memory_space<vmem>>, %arg5: memref<1x128xf32, #tpu.memory_space<vmem>>, %arg6: memref<1x8x128xf32, #tpu.memory_space<vmem>>, %arg7: memref<1x8x128xf32, #tpu.memory_space<vmem>>, %arg8: memref<1x1x128xf32, #tpu.memory_space<vmem>>, %arg9: memref<8x128xf32, #tpu.memory_space<vmem>>, %arg10: memref<1x128xf32, #tpu.memory_space<vmem>>) attributes {dimension_semantics = [#tpu.dimension_semantics<parallel>, #tpu.dimension_semantics<arbitrary>, #tpu.dimension_semantics<arbitrary>], iteration_bounds = array<i64: 4, 2, 2>, scalar_prefetch = 0 : i64, scratch_operands = 2 : i64, tpu.core_type = #tpu.core_type<tc>, window_params = [{transform_indices = @transform_0, window_bounds = array<i64: 1, 8, 128>}, {transform_indices = @transform_1, window_bounds = array<i64: 128, 128>}, {transform_indices = @transform_2, window_bounds = array<i64: 1, 128>}, {transform_indices = @transform_3, window_bounds = array<i64: 1, 8, 128>}, {transform_indices = @transform_4, window_bounds = array<i64: 1, 8, 128>}, {transform_indices = @transform_5, window_bounds = array<i64: 1, 1, 128>}]} {
    %c0_i32 = arith.constant 0 : i32
    %0 = arith.cmpi eq, %arg2, %c0_i32 : i32
    %1 = arith.extui %0 : i1 to i32
    %c0_i32_0 = arith.constant 0 : i32
    %2 = arith.cmpi ne, %1, %c0_i32_0 : i32
    scf.if %2 {
      %cst_16 = arith.constant 0.000000e+00 : f32
      %23 = vector.broadcast %cst_16 : f32 to vector<8x128xf32>
      %c0_17 = arith.constant 0 : index
      %c0_18 = arith.constant 0 : index
      %24 = vector.load %arg9[%c0_17, %c0_18] : memref<8x128xf32, #tpu.memory_space<vmem>>, vector<8x128xf32>
      tpu.vector_store %arg9[%c0_17, %c0_18], %23 {strides = array<i32>} : memref<8x128xf32, #tpu.memory_space<vmem>>, vector<8x128xf32>,
    } else {
    }
    %c0_i32_1 = arith.constant 0 : i32
    %3 = arith.cmpi eq, %arg1, %c0_i32_1 : i32
    %c0_i32_2 = arith.constant 0 : i32
    %4 = arith.cmpi eq, %arg2, %c0_i32_2 : i32
    %5 = arith.andi %3, %4 : i1
    %6 = arith.extui %5 : i1 to i32
    %c0_i32_3 = arith.constant 0 : i32
    %7 = arith.cmpi ne, %6, %c0_i32_3 : i32
    scf.if %7 {
      %cst_16 = arith.constant 0.000000e+00 : f32
      %23 = vector.broadcast %cst_16 : f32 to vector<1x128xf32>
      %c0_17 = arith.constant 0 : index
      %c0_18 = arith.constant 0 : index
      %24 = vector.load %arg10[%c0_17, %c0_18] : memref<1x128xf32, #tpu.memory_space<vmem>>, vector<1x128xf32>
      tpu.vector_store %arg10[%c0_17, %c0_18], %23 {strides = array<i32>} : memref<1x128xf32, #tpu.memory_space<vmem>>, vector<1x128xf32>,
    } else {
    }
    %c0 = arith.constant 0 : index
    %c0_4 = arith.constant 0 : index
    %8 = vector.load %arg9[%c0, %c0_4] : memref<8x128xf32, #tpu.memory_space<vmem>>, vector<8x128xf32>
    %c0_5 = arith.constant 0 : index
    %c0_6 = arith.constant 0 : index
    %c0_7 = arith.constant 0 : index
    %9 = vector.load %arg3[%c0_5, %c0_6, %c0_7] : memref<1x8x128xbf16, #tpu.memory_space<vmem>>, vector<1x8x128xbf16>
    %10 = vector.shape_cast %9 : vector<1x8x128xbf16> to vector<8x128xbf16>
    %c0_8 = arith.constant 0 : index
    %c0_9 = arith.constant 0 : index
    %11 = vector.load %arg4[%c0_8, %c0_9] : memref<128x128xbf16, #tpu.memory_space<vmem>>, vector<128x128xbf16>
    %cst = arith.constant dense<0.000000e+00> : vector<8x128xf32>
    %12 = tpu.matmul %10, %11, %cst {dimension_numbers = #tpu.dot_dimension_numbers<[1], [0], [0], [1], [0, 0, 1, 1], [], []>} : vector<8x128xbf16>, vector<128x128xbf16>, vector<8x128xf32> -> vector<8x128xf32>
    %13 = arith.addf %8, %12 : vector<8x128xf32>
    %c0_10 = arith.constant 0 : index
    %c0_11 = arith.constant 0 : index
    %14 = vector.load %arg9[%c0_10, %c0_11] : memref<8x128xf32, #tpu.memory_space<vmem>>, vector<8x128xf32>
    tpu.vector_store %arg9[%c0_10, %c0_11], %13 {strides = array<i32>} : memref<8x128xf32, #tpu.memory_space<vmem>>, vector<8x128xf32>,
    %c1_i32 = arith.constant 1 : i32
    %15 = arith.cmpi eq, %arg2, %c1_i32 : i32
    %16 = arith.extui %15 : i1 to i32
    %c0_i32_12 = arith.constant 0 : i32
    %17 = arith.cmpi ne, %16, %c0_i32_12 : i32
    scf.if %17 {
      %c0_16 = arith.constant 0 : index
      %c0_17 = arith.constant 0 : index
      %23 = vector.load %arg9[%c0_16, %c0_17] : memref<8x128xf32, #tpu.memory_space<vmem>>, vector<8x128xf32>
      %c0_18 = arith.constant 0 : index
      %c0_19 = arith.constant 0 : index
      %24 = vector.load %arg5[%c0_18, %c0_19] : memref<1x128xf32, #tpu.memory_space<vmem>>, vector<1x128xf32>
      %25 = vector.broadcast %24 : vector<1x128xf32> to vector<8x128xf32>
      %26 = arith.addf %23, %25 : vector<8x128xf32>
      %c0_20 = arith.constant 0 : index
      %c0_21 = arith.constant 0 : index
      %c0_22 = arith.constant 0 : index
      %27 = vector.load %arg7[%c0_20, %c0_21, %c0_22] : memref<1x8x128xf32, #tpu.memory_space<vmem>>, vector<1x8x128xf32>
      %28 = vector.shape_cast %27 : vector<1x8x128xf32> to vector<8x128xf32>
      %29 = vector.shape_cast %26 : vector<8x128xf32> to vector<1x8x128xf32>
      tpu.vector_store %arg7[%c0_20, %c0_21, %c0_22], %29 {strides = array<i32>} : memref<1x8x128xf32, #tpu.memory_space<vmem>>, vector<1x8x128xf32>,
      %c0_23 = arith.constant 0 : index
      %c0_24 = arith.constant 0 : index
      %c0_25 = arith.constant 0 : index
      %30 = vector.load %arg6[%c0_23, %c0_24, %c0_25] : memref<1x8x128xf32, #tpu.memory_space<vmem>>, vector<1x8x128xf32>
      %31 = vector.shape_cast %30 : vector<1x8x128xf32> to vector<8x128xf32>
      %32 = arith.subf %26, %31 : vector<8x128xf32>
      %c0_26 = arith.constant 0 : index
      %c0_27 = arith.constant 0 : index
      %33 = vector.load %arg10[%c0_26, %c0_27] : memref<1x128xf32, #tpu.memory_space<vmem>>, vector<1x128xf32>
      %34 = arith.mulf %32, %32 : vector<8x128xf32>
      %cst_28 = arith.constant dense<0.000000e+00> : vector<128xf32>
      %35 = vector.multi_reduction <add>, %34, %cst_28 [0] : vector<8x128xf32> to vector<128xf32>
      %36 = vector.shape_cast %35 : vector<128xf32> to vector<1x128xf32>
      %37 = arith.addf %33, %36 : vector<1x128xf32>
      %c0_29 = arith.constant 0 : index
      %c0_30 = arith.constant 0 : index
      %38 = vector.load %arg10[%c0_29, %c0_30] : memref<1x128xf32, #tpu.memory_space<vmem>>, vector<1x128xf32>
      tpu.vector_store %arg10[%c0_29, %c0_30], %37 {strides = array<i32>} : memref<1x128xf32, #tpu.memory_space<vmem>>, vector<1x128xf32>,
    } else {
    }
    %c1_i32_13 = arith.constant 1 : i32
    %18 = arith.cmpi eq, %arg1, %c1_i32_13 : i32
    %c1_i32_14 = arith.constant 1 : i32
    %19 = arith.cmpi eq, %arg2, %c1_i32_14 : i32
    %20 = arith.andi %18, %19 : i1
    %21 = arith.extui %20 : i1 to i32
    %c0_i32_15 = arith.constant 0 : i32
    %22 = arith.cmpi ne, %21, %c0_i32_15 : i32
    scf.if %22 {
      %c0_16 = arith.constant 0 : index
      %c0_17 = arith.constant 0 : index
      %23 = vector.load %arg10[%c0_16, %c0_17] : memref<1x128xf32, #tpu.memory_space<vmem>>, vector<1x128xf32>
      %cst_18 = arith.constant dense<0.000000e+00> : vector<1xf32>
      %24 = vector.multi_reduction <add>, %23, %cst_18 [1] : vector<1x128xf32> to vector<1xf32>
      %25 = vector.shape_cast %24 : vector<1xf32> to vector<1x1xf32>
      %cst_19 = arith.constant 4.8828125E-4 : f32
      %26 = vector.broadcast %cst_19 : f32 to vector<1x1xf32>
      %27 = arith.mulf %25, %26 : vector<1x1xf32>
      %28 = vector.shape_cast %27 : vector<1x1xf32> to vector<1x1xf32>
      %29 = vector.broadcast %28 : vector<1x1xf32> to vector<1x128xf32>
      %c0_20 = arith.constant 0 : index
      %c0_21 = arith.constant 0 : index
      %c0_22 = arith.constant 0 : index
      %30 = vector.load %arg8[%c0_20, %c0_21, %c0_22] : memref<1x1x128xf32, #tpu.memory_space<vmem>>, vector<1x1x128xf32>
      %31 = vector.shape_cast %30 : vector<1x1x128xf32> to vector<1x128xf32>
      %32 = vector.shape_cast %29 : vector<1x128xf32> to vector<1x1x128xf32>
      tpu.vector_store %arg8[%c0_20, %c0_21, %c0_22], %32 {strides = array<i32>} : memref<1x1x128xf32, #tpu.memory_space<vmem>>, vector<1x1x128xf32>,
    } else {
    }
    return
  }
  func.func @transform_0(%arg0: i32, %arg1: i32, %arg2: i32) -> (i32, i32, i32) {
    %c0_i32 = arith.constant 0 : i32
    %c0_i32_0 = arith.constant 0 : i32
    return %arg0, %c0_i32, %arg2 : i32, i32, i32
  }
  func.func @transform_1(%arg0: i32, %arg1: i32, %arg2: i32) -> (i32, i32) {
    %c0_i32 = arith.constant 0 : i32
    return %arg2, %arg1 : i32, i32
  }
  func.func @transform_2(%arg0: i32, %arg1: i32, %arg2: i32) -> (i32, i32) {
    %c0_i32 = arith.constant 0 : i32
    %c0_i32_0 = arith.constant 0 : i32
    return %c0_i32, %arg1 : i32, i32
  }
  func.func @transform_3(%arg0: i32, %arg1: i32, %arg2: i32) -> (i32, i32, i32) {
    %c0_i32 = arith.constant 0 : i32
    %c0_i32_0 = arith.constant 0 : i32
    return %arg0, %c0_i32, %arg1 : i32, i32, i32
  }
  func.func @transform_4(%arg0: i32, %arg1: i32, %arg2: i32) -> (i32, i32, i32) {
    %c0_i32 = arith.constant 0 : i32
    %c0_i32_0 = arith.constant 0 : i32
    return %arg0, %c0_i32, %arg1 : i32, i32, i32
  }
  func.func @transform_5(%arg0: i32, %arg1: i32, %arg2: i32) -> (i32, i32, i32) {
    %c0_i32 = arith.constant 0 : i32
    %c0_i32_0 = arith.constant 0 : i32
    %c0_i32_1 = arith.constant 0 : i32
    return %arg0, %c0_i32, %c0_i32_0 : i32, i32, i32
  }
}

</mosaic_0001>

<llo_original>
// kernel: fused_eval_steps.1
$region0: #{fused_eval_steps.1}
  #allocation0 [shape = 'u32[]', space=smem, size = 0x4, offset = 0x4, fixed_abs, tag = 'smem constant byte address 0x4 - core index']
  #allocation1 [shape = 'u32[144,128]{1,0:T(1,128)}', space=vmem, size = 0x12000, scoped, tag = 'internal scratch']
  #allocation2 [shape = 'f32[8,128]{1,0:T(8,128)}', space=vmem, size = 0x1000, scoped, tag = 'scratch operand']
  #allocation3 [shape = 'f32[1,128]{1,0:T(1,128)}', space=vmem, size = 0x200, scoped, tag = 'scratch operand']
  %s0 = inlined_call_operand.vmem [shape: bf16[4,8,256], index: 0, kind: input, shape index: {}]
  %s1 = inlined_call_operand.vmem [shape: bf16[256,256], index: 1, kind: input, shape index: {}]
  %s2 = inlined_call_operand.vmem [shape: f32[1,256], index: 2, kind: input, shape index: {}]
  %s3 = inlined_call_operand.vmem [shape: f32[4,8,256], index: 3, kind: input, shape index: {}]
  %s4 = inlined_call_operand.hbm [shape: f32[4,8,256], index: 4, kind: output, shape index: {0}]
  %s5 = inlined_call_operand.vmem [shape: f32[4,1,128], index: 5, kind: output, shape index: {1}]
  %6 = xla_tuple %s4, %s5
  %s7 = sld [smem:[#allocation0]]
  $region114: #{fused_eval_steps.1} parent=0
    _
  %s9 = ssub.s32 1, %s7
  %s10 = scalar_select 0, %s9, %s7
  $region1: #{fused_eval_steps.1} parent=0
    #allocation4 [shape = 'u8[65536]{0}', space=vmem, size = 0x10000, scoped, tag = 'input window, operand 1']
    #allocation5 [shape = 'u8[8192]{0}', space=vmem, size = 0x2000, scoped, tag = 'output window, operand 0']
    #allocation6 [shape = 's32[2]{0}', space=sflag, size = 0x8, scoped, tag = 'scoped memory for fused_eval_steps.1']
    %11 = vsyncpa [#allocation6], 0
    %s12 = scalar_lea.sflag [#allocation6], 1
    %13 = vsyncpa %s12, 0
    loop: start=0, step=1, limit=18
    $region2: #{fused_eval_steps.1} parent=1 // loop_pre_header
      _
    $region3: #{fused_eval_steps.1} parent=1 // loop_header
      %s15 = sphi 0, %s19
      %p16 = scmp.ge.s32.totalorder %s15, 18
      %s22 = sphi 0, %s41
      %s23 = sphi 0, %s37
      %s24 = sphi 0, %s33
      %s25 = sphi 0, %s22
      %s26 = sphi 0, %s23
      %s27 = sphi 0, %s24
      %s28 = sphi 0, %s25
      %s29 = sphi 0, %s26
      %s30 = sphi 0, %s27
      %s46 = sphi 0, %s48
      %s49 = sphi 0, %s46
      %s50 = sphi 0, %s49
      %s66 = sphi 0, %s50
      %s74 = sphi 0, %s76
      %s77 = sphi 0, %s74
      %s78 = sphi 0, %s77
      %s94 = sphi 0, %s78
      %s100 = sphi 0, %s102
      %s103 = sphi 0, %s100
      %s104 = sphi 0, %s103
      %s120 = sphi 0, %s104
      %s128 = sphi 0, %s130
      %s131 = sphi 0, %s128
      %s132 = sphi 0, %s131
      %s148 = sphi 0, %s132
      %s156 = sphi 0, %s158
      %s159 = sphi 0, %s156
      %s160 = sphi 0, %s159
      %s176 = sphi 0, %s160
      %s182 = sphi 0, %s184
      %s185 = sphi 0, %s182
      %s186 = sphi 0, %s185
      %s202 = sphi 0, %s186
    $region4: #{fused_eval_steps.1} parent=1 // loop_header_branch
      %18 = sbr.rel (%p16) target = $region8
    $region5: #{fused_eval_steps.1} parent=1 // loop_body
      %s20 = ssub.s32 %s15, 1
      %s21 = ssub.s32 %s15, 2
      %s31 = sadd.s32 1, %s24
      %p32 = scmp.ge.s32.totalorder %s31, 2
      %s33 = scalar_select %p32, 0, %s31
      %s34 = sadd.s32 1, %s23
      %s35 = scalar_select %p32, %s34, %s23
      %p36 = scmp.ge.s32.totalorder %s35, 2
      %s37 = scalar_select %p36, 0, %s35
      %s38 = sadd.s32 1, %s22
      %s39 = scalar_select %p36, %s38, %s22
      %p40 = scmp.ge.s32.totalorder %s39, 4
      %s41 = scalar_select %p40, 0, %s39
      %s42 = ssub.s32 %s22, %s41
      %s43 = ssub.s32 %s24, %s33
      %s44 = sor.u32 %s42, %s43
      %p45 = scmp.eq.s32.totalorder %s44, 0
      %s47 = sadd.s32 %s46, 1
      %s48 = scalar_select %p45, %s46, %s47
      %p51 = pneg %p45
      %p52 = scmp.eq.s32.totalorder %s15, 15
      %p53 = por %p51, %p52
      %p54 = scmp.ne.s32.totalorder %s46, %s49
      %p55 = scmp.eq.s32.totalorder %s15, 0
      %p56 = por %p54, %p55
      %p57 = scmp.ne.s32.totalorder %s46, %s49
      %p58 = scmp.eq.s32.totalorder %s20, 15
      %p59 = por %p57, %p58
      %p60 = scmp.ne.s32.totalorder %s49, %s50
      %p61 = scmp.eq.s32.totalorder %s20, 0
      %p62 = por %p60, %p61
      %p63 = scmp.ne.s32.totalorder %s49, %s50
      %p64 = scmp.eq.s32.totalorder %s21, 15
      %p65 = por %p63, %p64
      %p67 = scmp.ne.s32.totalorder %s50, %s66
      %p68 = scmp.eq.s32.totalorder %s21, 0
      %p69 = por %p67, %p68
      %s70 = ssub.s32 %s24, %s33
      %s71 = ssub.s32 %s23, %s37
      %s72 = sor.u32 %s70, %s71
      %p73 = scmp.eq.s32.totalorder %s72, 0
      %s75 = sadd.s32 %s74, 1
      %s76 = scalar_select %p73, %s74, %s75
      %p79 = pneg %p73
      %p80 = scmp.eq.s32.totalorder %s15, 15
      %p81 = por %p79, %p80
      %p82 = scmp.ne.s32.totalorder %s74, %s77
      %p83 = scmp.eq.s32.totalorder %s15, 0
      %p84 = por %p82, %p83
      %p85 = scmp.ne.s32.totalorder %s74, %s77
      %p86 = scmp.eq.s32.totalorder %s20, 15
      %p87 = por %p85, %p86
      %p88 = scmp.ne.s32.totalorder %s77, %s78
      %p89 = scmp.eq.s32.totalorder %s20, 0
      %p90 = por %p88, %p89
      %p91 = scmp.ne.s32.totalorder %s77, %s78
      %p92 = scmp.eq.s32.totalorder %s21, 15
      %p93 = por %p91, %p92
      %p95 = scmp.ne.s32.totalorder %s78, %s94
      %p96 = scmp.eq.s32.totalorder %s21, 0
      %p97 = por %p95, %p96
      %s98 = ssub.s32 %s23, %s37
      %p99 = scmp.eq.s32.totalorder %s98, 0
      %s101 = sadd.s32 %s100, 1
      %s102 = scalar_select %p99, %s100, %s101
      %p105 = pneg %p99
      %p106 = scmp.eq.s32.totalorder %s15, 15
      %p107 = por %p105, %p106
      %p108 = scmp.ne.s32.totalorder %s100, %s103
      %p109 = scmp.eq.s32.totalorder %s15, 0
      %p110 = por %p108, %p109
      %p111 = scmp.ne.s32.totalorder %s100, %s103
      %p112 = scmp.eq.s32.totalorder %s20, 15
      %p113 = por %p111, %p112
      %p114 = scmp.ne.s32.totalorder %s103, %s104
      %p115 = scmp.eq.s32.totalorder %s20, 0
      %p116 = por %p114, %p115
      %p117 = scmp.ne.s32.totalorder %s103, %s104
      %p118 = scmp.eq.s32.totalorder %s21, 15
      %p119 = por %p117, %p118
      %p121 = scmp.ne.s32.totalorder %s104, %s120
      %p122 = scmp.eq.s32.totalorder %s21, 0
      %p123 = por %p121, %p122
      %s124 = ssub.s32 %s22, %s41
      %s125 = ssub.s32 %s23, %s37
      %s126 = sor.u32 %s124, %s125
      %p127 = scmp.eq.s32.totalorder %s126, 0
      %s129 = sadd.s32 %s128, 1
      %s130 = scalar_select %p127, %s128, %s129
      %p133 = pneg %p127
      %p134 = scmp.eq.s32.totalorder %s15, 15
      %p135 = por %p133, %p134
      %p136 = scmp.ne.s32.totalorder %s128, %s131
      %p137 = scmp.eq.s32.totalorder %s15, 0
      %p138 = por %p136, %p137
      %p139 = scmp.ne.s32.totalorder %s128, %s131
      %p140 = scmp.eq.s32.totalorder %s20, 15
      %p141 = por %p139, %p140
      %p142 = scmp.ne.s32.totalorder %s131, %s132
      %p143 = scmp.eq.s32.totalorder %s20, 0
      %p144 = por %p142, %p143
      %p145 = scmp.ne.s32.totalorder %s131, %s132
      %p146 = scmp.eq.s32.totalorder %s21, 15
      %p147 = por %p145, %p146
      %p149 = scmp.ne.s32.totalorder %s132, %s148
      %p150 = scmp.eq.s32.totalorder %s21, 0
      %p151 = por %p149, %p150
      %s152 = ssub.s32 %s22, %s41
      %s153 = ssub.s32 %s23, %s37
      %s154 = sor.u32 %s152, %s153
      %p155 = scmp.eq.s32.totalorder %s154, 0
      %s157 = sadd.s32 %s156, 1
      %s158 = scalar_select %p155, %s156, %s157
      %p161 = pneg %p155
      %p162 = scmp.eq.s32.totalorder %s15, 15
      %p163 = por %p161, %p162
      %p164 = scmp.ne.s32.totalorder %s156, %s159
      %p165 = scmp.eq.s32.totalorder %s15, 0
      %p166 = por %p164, %p165
      %p167 = scmp.ne.s32.totalorder %s156, %s159
      %p168 = scmp.eq.s32.totalorder %s20, 15
      %p169 = por %p167, %p168
      %p170 = scmp.ne.s32.totalorder %s159, %s160
      %p171 = scmp.eq.s32.totalorder %s20, 0
      %p172 = por %p170, %p171
      %p173 = scmp.ne.s32.totalorder %s159, %s160
      %p174 = scmp.eq.s32.totalorder %s21, 15
      %p175 = por %p173, %p174
      %p177 = scmp.ne.s32.totalorder %s160, %s176
      %p178 = scmp.eq.s32.totalorder %s21, 0
      %p179 = por %p177, %p178
      %s180 = ssub.s32 %s22, %s41
      %p181 = scmp.eq.s32.totalorder %s180, 0
      %s183 = sadd.s32 %s182, 1
      %s184 = scalar_select %p181, %s182, %s183
      %p187 = pneg %p181
      %p188 = scmp.eq.s32.totalorder %s15, 15
      %p189 = por %p187, %p188
      %p190 = scmp.ne.s32.totalorder %s182, %s185
      %p191 = scmp.eq.s32.totalorder %s15, 0
      %p192 = por %p190, %p191
      %p193 = scmp.ne.s32.totalorder %s182, %s185
      %p194 = scmp.eq.s32.totalorder %s20, 15
      %p195 = por %p193, %p194
      %p196 = scmp.ne.s32.totalorder %s185, %s186
      %p197 = scmp.eq.s32.totalorder %s20, 0
      %p198 = por %p196, %p197
      %p199 = scmp.ne.s32.totalorder %s185, %s186
      %p200 = scmp.eq.s32.totalorder %s21, 15
      %p201 = por %p199, %p200
      %p203 = scmp.ne.s32.totalorder %s186, %s202
      %p204 = scmp.eq.s32.totalorder %s21, 0
      %p205 = por %p203, %p204
      %p206 = scmp.le.s32.totalorder 1, %s15
      %p207 = scmp.lt.s32.totalorder %s15, 17
      %p208 = pnand %p206, %p207
      %p209 = pneg %p208
      // Predicated region
      $region9: #{fused_eval_steps.1} parent=5 // pred_check
        _
      $region10: #{fused_eval_steps.1} parent=5 // pred_check_branch
        %211 = sbr.rel (%p208) target = $region12
      $region11: #{fused_eval_steps.1} parent=5 // pred_region
        %s212 = ssub.s32 %s15, 1
      $region12: #{fused_eval_steps.1} parent=5 // pred_fallthru
        _
      %p213 = scmp.lt.s32.totalorder %s15, 16
      // Predicated region
      $region13: #{fused_eval_steps.1} parent=5 // pred_check
        %p214 = pneg %p213
      $region14: #{fused_eval_steps.1} parent=5 // pred_check_branch
        %216 = sbr.rel (%p214) target = $region16
      $region15: #{fused_eval_steps.1} parent=5 // pred_region
        // Predicated region
        $region17: #{fused_eval_steps.1} parent=15 // pred_check
          %p217 = pneg %p56
        $region18: #{fused_eval_steps.1} parent=15 // pred_check_branch
          %219 = sbr.rel (%p217) target = $region20
        $region19: #{fused_eval_steps.1} parent=15 // pred_region
          %p220 = scmp.lt.s32.totalorder %s22, 3
          %s221 = scalar_select %p220, %s22, 3
          %p222 = scmp.lt.s32.totalorder %s24, 1
          %s223 = scalar_select %p222, %s24, 1
          %s224 = smul.addr %s221, 2
          %s225 = sadd.s32 %s223, %s224
          %s226 = smul.addr %s225, 4
          %s227 = scalar_lea.vmem %s0, %s226
        $region20: #{fused_eval_steps.1} parent=15 // pred_fallthru
          _
        // Predicated region
        $region21: #{fused_eval_steps.1} parent=15 // pred_check
          %p228 = pneg %p84
        $region22: #{fused_eval_steps.1} parent=15 // pred_check_branch
          %230 = sbr.rel (%p228) target = $region24
        $region23: #{fused_eval_steps.1} parent=15 // pred_region
          %s231 = sand.u32 %s74, 1
          %s232 = sand.u32 %s74, 1
          %s233 = smul.addr %s232, 64
          %s234 = scalar_lea.vmem [#allocation4], %s233
          %s235 = smul.u32 16, %s24
          %s236 = smul.addr %s235, 2
          %s237 = sadd.s32 %s23, %s236
          %s238 = smul.addr %s237, 4
          %s239 = scalar_lea.vmem %s1, %s238
          // Predicated region
          $region25: #{fused_eval_steps.1} parent=23 // pred_check
            _
          $region26: #{fused_eval_steps.1} parent=23 // pred_check_branch
            %241 = sbr.rel (0) target = $region28
          $region27: #{fused_eval_steps.1} parent=23 // pred_region
            // Predicated region
            $region29: #{fused_eval_steps.1} parent=27 // pred_check
              _
            $region30: #{fused_eval_steps.1} parent=27 // pred_check_branch
              %243 = sbr.rel target = $region32
            $region31: #{fused_eval_steps.1} parent=27 // pred_region
              // Predicated region
              $region44: #{fused_eval_steps.1} parent=31 // pred_check
                _
              $region45: #{fused_eval_steps.1} parent=31 // pred_check_branch
                %289 = sbr.rel (0) target = $region47
              $region46: #{fused_eval_steps.1} parent=31 // pred_region
                loop: start=0, step=1, limit=1
                $region48: #{fused_eval_steps.1} parent=46 // loop_pre_header
                  _
                $region49: #{fused_eval_steps.1} parent=46 // loop_header
                  %s291 = sphi 0, %s295
                  %p292 = scmp.ge.s32.totalorder %s291, 1
                  %s296 = sphi %s239, %s239
                  %s297 = sphi %s234, %s234
                $region50: #{fused_eval_steps.1} parent=46 // loop_header_branch
                  %294 = sbr.rel (%p292) target = $region54
                $region51: #{fused_eval_steps.1} parent=46 // loop_body
                  _
                $region52: #{fused_eval_steps.1} parent=46 // loop_footer
                  %s295 = sadd.s32 1, %s291
                $region53: #{fused_eval_steps.1} parent=46 // loop_footer_branch
                  %290 = sbr.rel target = $region49
                $region54: #{fused_eval_steps.1} parent=46 // loop_exit
                  _
                %s299 = ssub.s32 16, 1
                loop: start=0, step=1, limit=1
                $region55: #{fused_eval_steps.1} parent=46 // loop_pre_header
                  _
                $region56: #{fused_eval_steps.1} parent=46 // loop_header
                  %s301 = sphi 0, %s305
                  %p302 = scmp.ge.s32.totalorder %s301, 1
                  %s306 = sphi %s239, %s239
                  %s307 = sphi %s234, %s234
                $region57: #{fused_eval_steps.1} parent=46 // loop_header_branch
                  %304 = sbr.rel (%p302) target = $region61
                $region58: #{fused_eval_steps.1} parent=46 // loop_body
                  %v308 = vld [vmem:[%s306] sm:%s299]
                  %309 = vst [vmem:[%s307] sm:%s299] %v308
                  %v310 = vld [vmem:[%s306 + $0x8] sm:%s299]
                  %311 = vst [vmem:[%s307 + $0x4] sm:%s299] %v310
                  %v312 = vld [vmem:[%s306 + $0x10] sm:%s299]
                  %313 = vst [vmem:[%s307 + $0x8] sm:%s299] %v312
                  %v314 = vld [vmem:[%s306 + $0x18] sm:%s299]
                  %315 = vst [vmem:[%s307 + $0xc] sm:%s299] %v314
                  %v316 = vld [vmem:[%s306 + $0x20] sm:%s299]
                  %317 = vst [vmem:[%s307 + $0x10] sm:%s299] %v316
                  %v318 = vld [vmem:[%s306 + $0x28] sm:%s299]
                  %319 = vst [vmem:[%s307 + $0x14] sm:%s299] %v318
                  %v320 = vld [vmem:[%s306 + $0x30] sm:%s299]
                  %321 = vst [vmem:[%s307 + $0x18] sm:%s299] %v320
                  %v322 = vld [vmem:[%s306 + $0x38] sm:%s299]
                  %323 = vst [vmem:[%s307 + $0x1c] sm:%s299] %v322
                  %v324 = vld [vmem:[%s306 + $0x40] sm:%s299]
                  %325 = vst [vmem:[%s307 + $0x20] sm:%s299] %v324
                  %v326 = vld [vmem:[%s306 + $0x48] sm:%s299]
                  %327 = vst [vmem:[%s307 + $0x24] sm:%s299] %v326
                  %v328 = vld [vmem:[%s306 + $0x50] sm:%s299]
                  %329 = vst [vmem:[%s307 + $0x28] sm:%s299] %v328
                  %v330 = vld [vmem:[%s306 + $0x58] sm:%s299]
                  %331 = vst [vmem:[%s307 + $0x2c] sm:%s299] %v330
                  %v332 = vld [vmem:[%s306 + $0x60] sm:%s299]
                  %333 = vst [vmem:[%s307 + $0x30] sm:%s299] %v332
                  %v334 = vld [vmem:[%s306 + $0x68] sm:%s299]
                  %335 = vst [vmem:[%s307 + $0x34] sm:%s299] %v334
                  %v336 = vld [vmem:[%s306 + $0x70] sm:%s299]
                  %337 = vst [vmem:[%s307 + $0x38] sm:%s299] %v336
                  %v338 = vld [vmem:[%s306 + $0x78] sm:%s299]
                  %339 = vst [vmem:[%s307 + $0x3c] sm:%s299] %v338
                $region59: #{fused_eval_steps.1} parent=46 // loop_footer
                  %s305 = sadd.s32 1, %s301
                $region60: #{fused_eval_steps.1} parent=46 // loop_footer_branch
                  %300 = sbr.rel target = $region56
                $region61: #{fused_eval_steps.1} parent=46 // loop_exit
                  _
              $region47: #{fused_eval_steps.1} parent=31 // pred_fallthru
                _
            $region32: #{fused_eval_steps.1} parent=27 // pred_fallthru
              _
            // Predicated region
            $region33: #{fused_eval_steps.1} parent=27 // pred_check
              _
            $region34: #{fused_eval_steps.1} parent=27 // pred_check_branch
              %245 = sbr.rel (0) target = $region36
            $region35: #{fused_eval_steps.1} parent=27 // pred_region
              %s247 = ssub.s32 16, 1
              loop: start=0, step=1, limit=1
              $region37: #{fused_eval_steps.1} parent=35 // loop_pre_header
                _
              $region38: #{fused_eval_steps.1} parent=35 // loop_header
                %s249 = sphi 0, %s253
                %p250 = scmp.ge.s32.totalorder %s249, 1
                %s254 = sphi %s239, %s239
                %s255 = sphi %s234, %s234
              $region39: #{fused_eval_steps.1} parent=35 // loop_header_branch
                %252 = sbr.rel (%p250) target = $region43
              $region40: #{fused_eval_steps.1} parent=35 // loop_body
                %v256 = vld [vmem:[%s254] sm:%s247]
                %257 = vst [vmem:[%s255] sm:%s247] %v256
                %v258 = vld [vmem:[%s254 + $0x8] sm:%s247]
                %259 = vst [vmem:[%s255 + $0x4] sm:%s247] %v258
                %v260 = vld [vmem:[%s254 + $0x10] sm:%s247]
                %261 = vst [vmem:[%s255 + $0x8] sm:%s247] %v260
                %v262 = vld [vmem:[%s254 + $0x18] sm:%s247]
                %263 = vst [vmem:[%s255 + $0xc] sm:%s247] %v262
                %v264 = vld [vmem:[%s254 + $0x20] sm:%s247]
                %265 = vst [vmem:[%s255 + $0x10] sm:%s247] %v264
                %v266 = vld [vmem:[%s254 + $0x28] sm:%s247]
                %267 = vst [vmem:[%s255 + $0x14] sm:%s247] %v266
                %v268 = vld [vmem:[%s254 + $0x30] sm:%s247]
                %269 = vst [vmem:[%s255 + $0x18] sm:%s247] %v268
                %v270 = vld [vmem:[%s254 + $0x38] sm:%s247]
                %271 = vst [vmem:[%s255 + $0x1c] sm:%s247] %v270
                %v272 = vld [vmem:[%s254 + $0x40] sm:%s247]
                %273 = vst [vmem:[%s255 + $0x20] sm:%s247] %v272
                %v274 = vld [vmem:[%s254 + $0x48] sm:%s247]
                %275 = vst [vmem:[%s255 + $0x24] sm:%s247] %v274
                %v276 = vld [vmem:[%s254 + $0x50] sm:%s247]
                %277 = vst [vmem:[%s255 + $0x28] sm:%s247] %v276
                %v278 = vld [vmem:[%s254 + $0x58] sm:%s247]
                %279 = vst [vmem:[%s255 + $0x2c] sm:%s247] %v278
                %v280 = vld [vmem:[%s254 + $0x60] sm:%s247]
                %281 = vst [vmem:[%s255 + $0x30] sm:%s247] %v280
                %v282 = vld [vmem:[%s254 + $0x68] sm:%s247]
                %283 = vst [vmem:[%s255 + $0x34] sm:%s247] %v282
                %v284 = vld [vmem:[%s254 + $0x70] sm:%s247]
                %285 = vst [vmem:[%s255 + $0x38] sm:%s247] %v284
                %v286 = vld [vmem:[%s254 + $0x78] sm:%s247]
                %287 = vst [vmem:[%s255 + $0x3c] sm:%s247] %v286
              $region41: #{fused_eval_steps.1} parent=35 // loop_footer
                %s253 = sadd.s32 1, %s249
              $region42: #{fused_eval_steps.1} parent=35 // loop_footer_branch
                %248 = sbr.rel target = $region38
              $region43: #{fused_eval_steps.1} parent=35 // loop_exit
                _
            $region36: #{fused_eval_steps.1} parent=27 // pred_fallthru
              _
          $region28: #{fused_eval_steps.1} parent=23 // pred_fallthru
            _
          %340 = vnop
        $region24: #{fused_eval_steps.1} parent=15 // pred_fallthru
          _
        // Predicated region
        $region62: #{fused_eval_steps.1} parent=15 // pred_check
          %p341 = pneg %p110
        $region63: #{fused_eval_steps.1} parent=15 // pred_check_branch
          %343 = sbr.rel (%p341) target = $region65
        $region64: #{fused_eval_steps.1} parent=15 // pred_region
          %p344 = scmp.lt.s32.totalorder %s23, 1
          %s345 = scalar_select %p344, %s23, 1
          %s346 = scalar_lea.vmem %s2, %s345
        $region65: #{fused_eval_steps.1} parent=15 // pred_fallthru
          _
        // Predicated region
        $region66: #{fused_eval_steps.1} parent=15 // pred_check
          %p347 = pneg %p138
        $region67: #{fused_eval_steps.1} parent=15 // pred_check_branch
          %349 = sbr.rel (%p347) target = $region69
        $region68: #{fused_eval_steps.1} parent=15 // pred_region
          %p350 = scmp.lt.s32.totalorder %s22, 3
          %s351 = scalar_select %p350, %s22, 3
          %p352 = scmp.lt.s32.totalorder %s23, 1
          %s353 = scalar_select %p352, %s23, 1
          %s354 = smul.addr %s351, 2
          %s355 = sadd.s32 %s353, %s354
          %s356 = smul.addr %s355, 8
          %s357 = scalar_lea.vmem %s3, %s356
        $region69: #{fused_eval_steps.1} parent=15 // pred_fallthru
          _
      $region16: #{fused_eval_steps.1} parent=5 // pred_fallthru
        _
      %p358 = scmp.le.s32.totalorder 1, %s15
      %p359 = scmp.lt.s32.totalorder %s15, 17
      %p360 = pnand %p358, %p359
      %p361 = pneg %p360
      // Predicated region
      $region70: #{fused_eval_steps.1} parent=5 // pred_check
        _
      $region71: #{fused_eval_steps.1} parent=5 // pred_check_branch
        %363 = sbr.rel (%p360) target = $region73
      $region72: #{fused_eval_steps.1} parent=5 // pred_region
        %s364 = ssub.s32 %s15, 1
        %s365 = sand.u32 %s77, 1
        %s366 = sand.u32 %s77, 1
        %s367 = smul.addr %s366, 64
        %s368 = scalar_lea.vmem [#allocation4], %s367
        // Predicated region
        $region74: #{fused_eval_steps.1} parent=72 // pred_check
          %p369 = pneg %p90
        $region75: #{fused_eval_steps.1} parent=72 // pred_check_branch
          %371 = sbr.rel (%p369) target = $region77
        $region76: #{fused_eval_steps.1} parent=72 // pred_region
          _
        $region77: #{fused_eval_steps.1} parent=72 // pred_fallthru
          _
        %p372 = scmp.lt.s32.totalorder %s25, 3
        %s373 = scalar_select %p372, %s25, 3
        %p374 = scmp.lt.s32.totalorder %s27, 1
        %s375 = scalar_select %p374, %s27, 1
        %s376 = smul.addr %s373, 2
        %s377 = sadd.s32 %s375, %s376
        %s378 = smul.addr %s377, 4
        %s379 = scalar_lea.vmem %s0, %s378
        %p380 = pneg %p62
        %p381 = pneg %p59
        %s382 = sand.u32 %s77, 1
        %s383 = sand.u32 %s77, 1
        %s384 = smul.addr %s383, 64
        %s385 = scalar_lea.vmem [#allocation4], %s384
        %p386 = pneg %p90
        %p387 = pneg %p87
        %p388 = scmp.lt.s32.totalorder %s26, 1
        %s389 = scalar_select %p388, %s26, 1
        %s390 = scalar_lea.vmem %s2, %s389
        %p391 = pneg %p116
        %p392 = pneg %p113
        %p393 = scmp.lt.s32.totalorder %s25, 3
        %s394 = scalar_select %p393, %s25, 3
        %p395 = scmp.lt.s32.totalorder %s26, 1
        %s396 = scalar_select %p395, %s26, 1
        %s397 = smul.addr %s394, 2
        %s398 = sadd.s32 %s396, %s397
        %s399 = smul.addr %s398, 8
        %s400 = scalar_lea.vmem %s3, %s399
        %p401 = pneg %p144
        %p402 = pneg %p141
        %p403 = pneg %p172
        %p404 = pneg %p169
        %s405 = sand.u32 %s159, 1
        %s406 = scalar_lea.sflag [#allocation6], %s405
        %s407 = sand.u32 %s159, 1
        %s408 = smul.addr %s407, 8
        %s409 = scalar_lea.vmem [#allocation5], %s408
        %p410 = pneg %p198
        %p411 = pneg %p195
        %p412 = scmp.lt.s32.totalorder %s25, 3
        %s413 = scalar_select %p412, %s25, 3
        %s414 = scalar_lea.vmem %s5, %s413
        %p415 = scmp.lt.s32.totalorder %s25, 3
        %s416 = scalar_select %p415, %s25, 3
        %p417 = scmp.lt.s32.totalorder %s27, 1
        %s418 = scalar_select %p417, %s27, 1
        %s419 = smul.addr %s416, 2
        %s420 = sadd.s32 %s418, %s419
        %s421 = smul.addr %s420, 4
        %s422 = scalar_lea.vmem %s0, %s421
        %s423 = smul.u32 16, %s27
        %p424 = scmp.lt.s32.totalorder %s26, 1
        %s425 = scalar_select %p424, %s26, 1
        %s426 = scalar_lea.vmem %s2, %s425
        %p427 = scmp.lt.s32.totalorder %s25, 3
        %s428 = scalar_select %p427, %s25, 3
        %p429 = scmp.lt.s32.totalorder %s26, 1
        %s430 = scalar_select %p429, %s26, 1
        %s431 = smul.addr %s428, 2
        %s432 = sadd.s32 %s430, %s431
        %s433 = smul.addr %s432, 8
        %s434 = scalar_lea.vmem %s3, %s433
        %p435 = scmp.lt.s32.totalorder %s25, 3
        %s436 = scalar_select %p435, %s25, 3
        %s437 = scalar_lea.vmem %s5, %s436
        %p439 = scmp.eq.s32.totalorder %s27, 0
        // Predicated region
        $region78: #{fused_eval_steps.1} parent=72 // pred_check
          %p440 = pneg %p439
        $region79: #{fused_eval_steps.1} parent=72 // pred_check_branch
          %442 = sbr.rel (%p440) target = $region81
        $region80: #{fused_eval_steps.1} parent=72 // pred_region
          %443 = vst [vmem:[#allocation2] sm:$0xff] 0.0
        $region81: #{fused_eval_steps.1} parent=72 // pred_fallthru
          _
        %p444 = scmp.eq.s32.totalorder %s26, 0
        %p445 = pnand %p444, %p439
        %p446 = pneg %p445
        // Predicated region
        $region82: #{fused_eval_steps.1} parent=72 // pred_check
          _
        $region83: #{fused_eval_steps.1} parent=72 // pred_check_branch
          %448 = sbr.rel (%p445) target = $region85
        $region84: #{fused_eval_steps.1} parent=72 // pred_region
          %449 = vst [vmem:[#allocation3] sm:$0x1] 0.0
        $region85: #{fused_eval_steps.1} parent=72 // pred_fallthru
          _
        %v450 = vld [vmem:[#allocation2] sm:$0xff]
        %v451 = vld [vmem:[%s422] sm:$0xf]
        %v452 = vld [vmem:[%s368] sm:$0xf]
        %v453 = vld [vmem:[%s368 + $0x4] sm:$0xf]
        %v454 = vld [vmem:[%s368 + $0x8] sm:$0xf]
        %v455 = vld [vmem:[%s368 + $0xc] sm:$0xf]
        %v456 = vld [vmem:[%s368 + $0x10] sm:$0xf]
        %v457 = vld [vmem:[%s368 + $0x14] sm:$0xf]
        %v458 = vld [vmem:[%s368 + $0x18] sm:$0xf]
        %v459 = vld [vmem:[%s368 + $0x1c] sm:$0xf]
        %v460 = vld [vmem:[%s368 + $0x20] sm:$0xf]
        %v461 = vld [vmem:[%s368 + $0x24] sm:$0xf]
        %v462 = vld [vmem:[%s368 + $0x28] sm:$0xf]
        %v463 = vld [vmem:[%s368 + $0x2c] sm:$0xf]
        %v464 = vld [vmem:[%s368 + $0x30] sm:$0xf]
        %v465 = vld [vmem:[%s368 + $0x34] sm:$0xf]
        %v466 = vld [vmem:[%s368 + $0x38] sm:$0xf]
        %v467 = vld [vmem:[%s368 + $0x3c] sm:$0xf]
        %v484 = vunpack.c.l.b16 %v452
        %v485 = vunpack.c.l.b16 %v453
        %v486 = vunpack.c.l.b16 %v454
        %v487 = vunpack.c.l.b16 %v455
        %v488 = vunpack.c.l.b16 %v456
        %v489 = vunpack.c.l.b16 %v457
        %v490 = vunpack.c.l.b16 %v458
        %v491 = vunpack.c.l.b16 %v459
        %v492 = vunpack.c.l.b16 %v460
        %v493 = vunpack.c.l.b16 %v461
        %v494 = vunpack.c.l.b16 %v462
        %v495 = vunpack.c.l.b16 %v463
        %v496 = vunpack.c.l.b16 %v464
        %v497 = vunpack.c.l.b16 %v465
        %v498 = vunpack.c.l.b16 %v466
        %v499 = vunpack.c.l.b16 %v467
        %v500 = vpack.c.b16 %v485, %v484
        %v501 = vpack.c.b16 %v487, %v486
        %v502 = vpack.c.b16 %v489, %v488
        %v503 = vpack.c.b16 %v491, %v490
        %v504 = vpack.c.b16 %v493, %v492
        %v505 = vpack.c.b16 %v495, %v494
        %v506 = vpack.c.b16 %v497, %v496
        %v507 = vpack.c.b16 %v499, %v498
        %516 = vmatprep.subr.bf16.mxu0 0
        %517 = vmatpush1.bf16.msra.mxu0 %v507
        %518 = vmatprep.subr.bf16.mxu0 0
        %519 = vmatpush1.bf16.msra.mxu0 %v506
        %520 = vmatprep.subr.bf16.mxu0 0
        %521 = vmatpush1.bf16.msra.mxu0 %v505
        %522 = vmatprep.subr.bf16.mxu0 0
        %523 = vmatpush1.bf16.msra.mxu0 %v504
        %524 = vmatprep.subr.bf16.mxu0 0
        %525 = vmatpush1.bf16.msra.mxu0 %v503
        %526 = vmatprep.subr.bf16.mxu0 0
        %527 = vmatpush1.bf16.msra.mxu0 %v502
        %528 = vmatprep.subr.bf16.mxu0 0
        %529 = vmatpush1.bf16.msra.mxu0 %v501
        %530 = vmatprep.subr.bf16.mxu0 0
        %531 = vmatpush1.bf16.msra.mxu0 %v500
        %532 = vmatprep.subr.bf16.mxu0 0
        %533 = vmatpush2.bf16.msra.mxu0 0
        %534 = vmatprep.subr.bf16.mxu0 0
        %535 = vmatpush2.bf16.msra.mxu0 0
        %536 = vmatprep.subr.bf16.mxu0 0
        %537 = vmatpush2.bf16.msra.mxu0 0
        %538 = vmatprep.subr.bf16.mxu0 0
        %539 = vmatpush2.bf16.msra.mxu0 0
        %540 = vmatprep.subr.bf16.mxu0 0
        %541 = vmatpush2.bf16.msra.mxu0 0
        %542 = vmatprep.subr.bf16.mxu0 0
        %543 = vmatpush2.bf16.msra.mxu0 0
        %544 = vmatprep.subr.bf16.mxu0 0
        %545 = vmatpush2.bf16.msra.mxu0 0
        %546 = vmatprep.subr.bf16.mxu0 0
        %547 = vmatpush2.bf16.msra.mxu0 0
        %548 = vmatprep.mubr.bf16.mxu0 0
        %549 = vmatmul.mubr.bf16.gmra.mxu0 %v451
        %v550 = vpop.f32.mrf.mxu0
        %v551 = vadd.f32 0.0, %v550
        %v552 = vpop.f32.mrf.mxu0
        %v553 = vpop.f32.mrf.mxu0
        %v554 = vpop.f32.mrf.mxu0
        %555 = vdwg.mxu0
        %v556 = vadd.f32 %v450, %v551
        %557 = vst [vmem:[#allocation2] sm:$0xff] %v556
        %p558 = scmp.eq.s32.totalorder %s27, 1
        // Predicated region
        $region86: #{fused_eval_steps.1} parent=72 // pred_check
          %p559 = pneg %p558
        $region87: #{fused_eval_steps.1} parent=72 // pred_check_branch
          %561 = sbr.rel (%p559) target = $region89
        $region88: #{fused_eval_steps.1} parent=72 // pred_region
          %v562 = vld [vmem:[#allocation2] sm:$0xff]
          %v563 = vld [vmem:[%s426] sm:$0x1]
          %v565 = vlaneseq
          %v566 = vshrl.u32 %v565, 7
          %v567 = vsub.s32 0, %v566
          %v568 = vrot.slane %v563, %v567
          %v570 = vadd.f32 %v562, %v568
          %571 = vst [vmem:[%s409] sm:$0xff] %v570
          %v572 = vld [vmem:[%s434] sm:$0xff]
          %v573 = vsub.f32 %v570, %v572
          %v574 = vld [vmem:[#allocation3] sm:$0x1]
          %v575 = vmul.f32 %v573, %v573
          %v576 = vrot.slane %v575, 4
          %v577 = vadd.f32 %v575, %v576
          %v578 = vrot.slane %v577, 2
          %v579 = vadd.f32 %v577, %v578
          %v580 = vrot.slane %v579, 1
          %v581 = vadd.f32 %v579, %v580
          %v582 = vadd.f32 %v574, %v581
          %583 = vst [vmem:[#allocation3] sm:$0x1] %v582
        $region89: #{fused_eval_steps.1} parent=72 // pred_fallthru
          _
        %p584 = scmp.eq.s32.totalorder %s26, 1
        %p585 = pnand %p584, %p558
        %p586 = pneg %p585
        // Predicated region
        $region90: #{fused_eval_steps.1} parent=72 // pred_check
          _
        $region91: #{fused_eval_steps.1} parent=72 // pred_check_branch
          %588 = sbr.rel (%p585) target = $region93
        $region92: #{fused_eval_steps.1} parent=72 // pred_region
          %v589 = vld [vmem:[#allocation3] sm:$0x1]
          %vm590 = vcmask 1040384
          %v591 = vsel %vm590, %v589, 0.0
          %592 = vadd.xlane.f32.xlu0 %v591
          %v593 = vpop.xlane.xlu0 %592
          %v594 = vmul.f32 %v593, 0.00048828125
          %595 = vst [vmem:[%s437] sm:$0x1] %v594
        $region93: #{fused_eval_steps.1} parent=72 // pred_fallthru
          _
        %s596 = sand.u32 %s159, 1
        %s597 = scalar_lea.sflag [#allocation6], %s596
        %s598 = sand.u32 %s159, 1
        %s599 = smul.addr %s598, 8
        %s600 = scalar_lea.vmem [#allocation5], %s599
        %p601 = scmp.lt.s32.totalorder %s25, 3
        %s602 = scalar_select %p601, %s25, 3
        %s603 = scalar_lea.vmem %s5, %s602
        // Predicated region
        $region94: #{fused_eval_steps.1} parent=72 // pred_check
          %p604 = pneg %p169
        $region95: #{fused_eval_steps.1} parent=72 // pred_check_branch
          %606 = sbr.rel (%p604) target = $region97
        $region96: #{fused_eval_steps.1} parent=72 // pred_region
          %s608 = ssub.s32 128, 128
          %609 = vsyncadd %s597, %s608
          %s610 = smul.addr %s25, 2
          %s611 = sadd.s32 %s26, %s610
          %s612 = smul.addr %s611, 128
          %s613 = scalar_lea.hbm %s4, %s612
          %s615 = sshll.u32 %s600, 4
          %s616 = int_to_ptr.vmem [resolvable:$true] %s615
          %618 = dma.vmem_to_hbm [thread:$0]  %s616, 128, %s613, %s597
        $region97: #{fused_eval_steps.1} parent=72 // pred_fallthru
          _
        // Predicated region
        $region98: #{fused_eval_steps.1} parent=72 // pred_check
          %p619 = pneg %p195
        $region99: #{fused_eval_steps.1} parent=72 // pred_check_branch
          %621 = sbr.rel (%p619) target = $region101
        $region100: #{fused_eval_steps.1} parent=72 // pred_region
          _
        $region101: #{fused_eval_steps.1} parent=72 // pred_fallthru
          _
      $region73: #{fused_eval_steps.1} parent=5 // pred_fallthru
        _
      %p622 = scmp.le.s32.totalorder 2, %s15
      // Predicated region
      $region102: #{fused_eval_steps.1} parent=5 // pred_check
        %p623 = pneg %p622
      $region103: #{fused_eval_steps.1} parent=5 // pred_check_branch
        %625 = sbr.rel (%p623) target = $region105
      $region104: #{fused_eval_steps.1} parent=5 // pred_region
        %s626 = ssub.s32 %s15, 2
        // Predicated region
        $region106: #{fused_eval_steps.1} parent=104 // pred_check
          %p627 = pneg %p175
        $region107: #{fused_eval_steps.1} parent=104 // pred_check_branch
          %629 = sbr.rel (%p627) target = $region109
        $region108: #{fused_eval_steps.1} parent=104 // pred_region
          %s630 = sand.u32 %s160, 1
          %s631 = scalar_lea.sflag [#allocation6], %s630
          %s632 = sand.u32 %s160, 1
          %s633 = smul.addr %s632, 8
          %s634 = scalar_lea.vmem [#allocation5], %s633
          %635 = dma.done %s631, 128
        $region109: #{fused_eval_steps.1} parent=104 // pred_fallthru
          _
        // Predicated region
        $region110: #{fused_eval_steps.1} parent=104 // pred_check
          %p636 = pneg %p201
        $region111: #{fused_eval_steps.1} parent=104 // pred_check_branch
          %638 = sbr.rel (%p636) target = $region113
        $region112: #{fused_eval_steps.1} parent=104 // pred_region
          %p639 = scmp.lt.s32.totalorder %s28, 3
          %s640 = scalar_select %p639, %s28, 3
          %s641 = scalar_lea.vmem %s5, %s640
        $region113: #{fused_eval_steps.1} parent=104 // pred_fallthru
          _
      $region105: #{fused_eval_steps.1} parent=5 // pred_fallthru
        _
    $region6: #{fused_eval_steps.1} parent=1 // loop_footer
      %s19 = sadd.s32 1, %s15
    $region7: #{fused_eval_steps.1} parent=1 // loop_footer_branch
      %14 = sbr.rel target = $region3
    $region8: #{fused_eval_steps.1} parent=1 // loop_exit
      _
    %642 = vsyncpa [#allocation6], 1
    %s643 = scalar_lea.sflag [#allocation6], 1
    %644 = vsyncpa %s643, 1

</llo_original>
